<compile_context>
chip_gen: v7x
topology: tpu7x:2x2x1
jax: 0.10.0
libtpu: 0.0.40
codegen_flags: <defaults>
</compile_context>

<pallas_src>
import jax
import jax.numpy as jnp
from jax.experimental import pallas as pl
from jax.experimental.pallas import tpu as pltpu


def _standardize_kernel(x_ref, scale_ref, bias_ref, o_ref):
    # x_ref/o_ref: (tr, tl) tiles; scale_ref/bias_ref: (tr, 1) f32 blocks that
    # broadcast along lanes. One VPU multiply + add per element, f32 math.
    x = x_ref[...].astype(jnp.float32)
    o_ref[...] = (x * scale_ref[...] + bias_ref[...]).astype(o_ref.dtype)


def _pick_tiles(R: int, L: int, dtype, target_tile_bytes: int = 4 << 20):
    """Choose a (tr, tl) tile obeying the (8, 128) block constraint."""
    itemsize = jnp.dtype(dtype).itemsize
    # Packed-sublane multiple: f32 -> 8, bf16 -> 16, int8/fp8 -> 32.
    sub = max(8, 32 // itemsize)
    row_bytes = L * itemsize
    min_tr = R if R < sub else sub  # smallest legal/efficient row block

    if min_tr * row_bytes <= target_tile_bytes:
        # Case A: full contiguous rows per tile (single-descriptor DMA per
        # x/out tile); lane grid collapses to 1.
        tl = L
        if R < sub:
            tr = R  # full row dim is always a legal block extent
        else:
            tr = max(sub, ((target_tile_bytes // row_bytes) // sub) * sub)
            if tr >= R:
                tr = R
            if R >= 2 * sub:
                # Keep >= 2 row steps so both v7x TensorCores get work.
                tr = min(tr, max(sub, ((R // 2) // sub) * sub))
    else:
        # Case B: even a minimal row-group exceeds the budget -> split the
        # lane dim into 128-aligned chunks (guards the old unbounded tl = L).
        tr = min_tr
        tl = max(128, ((target_tile_bytes // (tr * itemsize)) // 128) * 128)
        tl = min(tl, L)
    return tr, tl


def standardize(x: jax.Array, mean: jax.Array, std: jax.Array) -> jax.Array:
    """x: (N, C, H, W); mean/std: (C,). Returns (x - mean[c]) / std[c]."""
    N, C, H, W = x.shape
    R, L = N * C, H * W
    itemsize = jnp.dtype(x.dtype).itemsize

    # Lane-dense 2-D view and per-row (n, c) -> c parameter expansion.
    x2 = x.reshape(R, L)

    # Fused scale/bias form, kept in float32. NOTE: std == 0 is unguarded
    # (inf/nan), matching the PyTorch reference's plain division.
    scale = 1.0 / std.astype(jnp.float32)
    bias = -mean.astype(jnp.float32) * scale
    row_scale = jnp.tile(scale, N).reshape(R, 1)
    row_bias = jnp.tile(bias, N).reshape(R, 1)

    tr, tl = _pick_tiles(R, L, x.dtype)
    n_row = pl.cdiv(R, tr)
    n_lane = pl.cdiv(L, tl)

    if n_lane == 1:
        grid = (n_row,)
        dims = ("parallel",)
        x_spec = pl.BlockSpec((tr, tl), lambda i: (i, 0))
        p_spec = pl.BlockSpec((tr, 1), lambda i: (i, 0))
        o_spec = pl.BlockSpec((tr, tl), lambda i: (i, 0))
    else:
        grid = (n_row, n_lane)
        dims = ("parallel", "parallel")
        x_spec = pl.BlockSpec((tr, tl), lambda i, j: (i, j))
        p_spec = pl.BlockSpec((tr, 1), lambda i, j: (i, 0))
        o_spec = pl.BlockSpec((tr, tl), lambda i, j: (i, j))

    # VMEM footprint: double-buffered x/out tiles + lane-padded (tr, 128) f32
    # parameter blocks + one f32 working copy of the tile; +50% headroom.
    tile_bytes = tr * tl * itemsize
    param_pad = ((tr + 7) // 8) * 8 * 128 * 4
    work_f32 = tr * tl * 4
    vmem_bytes = int(1.5 * (2 * (2 * tile_bytes + 2 * param_pad) + work_f32))
    vmem_bytes = max(vmem_bytes, 8 * 1024 * 1024)

    total = R * L
    cost = pl.CostEstimate(
        flops=2 * total,                                  # one mul + one add
        transcendentals=0,
        bytes_accessed=2 * total * itemsize + 2 * R * 4,  # x read + out write + params
    )

    out2 = pl.pallas_call(
        _standardize_kernel,
        out_shape=jax.ShapeDtypeStruct((R, L), x.dtype),
        grid=grid,
        in_specs=[x_spec, p_spec, p_spec],
        out_specs=o_spec,
        compiler_params=pltpu.CompilerParams(
            dimension_semantics=dims,
            vmem_limit_bytes=vmem_bytes,
        ),
        cost_estimate=cost,
    )(x2, row_scale, row_bias)

    return out2.reshape(N, C, H, W)


if __name__ == "__main__":
    # Deterministic "module parameters": per-channel mean/std (C = 4).
    N, C, H, W = 2, 4, 16, 16
    mean = jnp.array([0.485, 0.456, 0.406, 0.5], dtype=jnp.float32)
    std = jnp.array([0.229, 0.224, 0.225, 0.25], dtype=jnp.float32)

    key = jax.random.PRNGKey(0)
    x = jax.random.normal(key, (N, C, H, W), dtype=jnp.float32)

    out = standardize(x, mean, std)
    out = jax.block_until_ready(out)

    # Reference check (pure JAX, mirrors the PyTorch broadcasting semantics).
    ref = (x - mean.reshape(1, C, 1, 1)) / std.reshape(1, C, 1, 1)
    assert out.shape == x.shape and out.dtype == x.dtype
    assert jnp.allclose(out, ref, atol=1e-5, rtol=1e-5)

    print("KERNEL_OK")
</pallas_src>

<mosaic_0001>
module attributes {stable_mosaic.version = 11 : i64} {
  func.func @_standardize_kernel(%arg0: i32, %arg1: memref<8x256xf32, #tpu.memory_space<vmem>>, %arg2: memref<8x1xf32, #tpu.memory_space<vmem>>, %arg3: memref<8x1xf32, #tpu.memory_space<vmem>>, %arg4: memref<8x256xf32, #tpu.memory_space<vmem>>) attributes {dimension_semantics = [#tpu.dimension_semantics<parallel>], iteration_bounds = array<i64: 1>, scalar_prefetch = 0 : i64, scratch_operands = 0 : i64, tpu.core_type = #tpu.core_type<tc>, window_params = [{transform_indices = @transform_0, window_bounds = array<i64: 8, 256>}, {transform_indices = @transform_1, window_bounds = array<i64: 8, 1>}, {transform_indices = @transform_2, window_bounds = array<i64: 8, 1>}, {transform_indices = @transform_3, window_bounds = array<i64: 8, 256>}]} {
    %c0 = arith.constant 0 : index
    %c0_0 = arith.constant 0 : index
    %0 = vector.load %arg1[%c0, %c0_0] : memref<8x256xf32, #tpu.memory_space<vmem>>, vector<8x256xf32>
    %c0_1 = arith.constant 0 : index
    %c0_2 = arith.constant 0 : index
    %1 = vector.load %arg2[%c0_1, %c0_2] : memref<8x1xf32, #tpu.memory_space<vmem>>, vector<8x1xf32>
    %2 = vector.broadcast %1 : vector<8x1xf32> to vector<8x256xf32>
    %3 = arith.mulf %0, %2 : vector<8x256xf32>
    %c0_3 = arith.constant 0 : index
    %c0_4 = arith.constant 0 : index
    %4 = vector.load %arg3[%c0_3, %c0_4] : memref<8x1xf32, #tpu.memory_space<vmem>>, vector<8x1xf32>
    %5 = vector.broadcast %4 : vector<8x1xf32> to vector<8x256xf32>
    %6 = arith.addf %3, %5 : vector<8x256xf32>
    %c0_5 = arith.constant 0 : index
    %c0_6 = arith.constant 0 : index
    %7 = vector.load %arg4[%c0_5, %c0_6] : memref<8x256xf32, #tpu.memory_space<vmem>>, vector<8x256xf32>
    tpu.vector_store %arg4[%c0_5, %c0_6], %6 {strides = array<i32>} : memref<8x256xf32, #tpu.memory_space<vmem>>, vector<8x256xf32>,
    return
  }
  func.func @transform_0(%arg0: i32) -> (i32, i32) {
    %c0_i32 = arith.constant 0 : i32
    %c0_i32_0 = arith.constant 0 : i32
    return %arg0, %c0_i32 : i32, i32
  }
  func.func @transform_1(%arg0: i32) -> (i32, i32) {
    %c0_i32 = arith.constant 0 : i32
    %c0_i32_0 = arith.constant 0 : i32
    return %arg0, %c0_i32 : i32, i32
  }
  func.func @transform_2(%arg0: i32) -> (i32, i32) {
    %c0_i32 = arith.constant 0 : i32
    %c0_i32_0 = arith.constant 0 : i32
    return %arg0, %c0_i32 : i32, i32
  }
  func.func @transform_3(%arg0: i32) -> (i32, i32) {
    %c0_i32 = arith.constant 0 : i32
    %c0_i32_0 = arith.constant 0 : i32
    return %arg0, %c0_i32 : i32, i32
  }
}

</mosaic_0001>

<llo_original>
// kernel: tpu_custom_call.1
$region0: #{tpu_custom_call.1}
  #allocation0 [shape = 'u32[]', space=smem, size = 0x4, offset = 0x4, fixed_abs, tag = 'smem constant byte address 0x4 - core index']
  #allocation1 [shape = 'u32[144,128]{1,0:T(1,128)}', space=vmem, size = 0x12000, scoped, tag = 'internal scratch']
  %s0 = inlined_call_operand.vmem [shape: f32[8,256], index: 0, kind: input, shape index: {}]
  %s1 = inlined_call_operand.vmem [shape: f32[8,1], index: 1, kind: input, shape index: {}]
  %s2 = inlined_call_operand.vmem [shape: f32[8,1], index: 2, kind: input, shape index: {}]
  %s3 = inlined_call_operand.hbm [shape: f32[8,256], index: 3, kind: output, shape index: {}]
  %s4 = sld [smem:[#allocation0]]
  $region22: #{tpu_custom_call.1} parent=0
    _
  %s6 = ssub.s32 1, %s4
  %s7 = scalar_select 0, %s6, %s4
  $region1: #{tpu_custom_call.1} parent=0
    #allocation2 [shape = 'u8[8192]{0}', space=vmem, size = 0x2000, scoped, tag = 'output window, operand 0, single buffered']
    #allocation3 [shape = 's32[1]{0}', space=sflag, size = 0x4, scoped, tag = 'scoped memory for tpu_custom_call.1']
    %8 = vsyncpa [#allocation3], 0
    // Predicated region
    $region2: #{tpu_custom_call.1} parent=1 // pred_check
      _
    $region3: #{tpu_custom_call.1} parent=1 // pred_check_branch
      %10 = sbr.rel (0) target = $region5
    $region4: #{tpu_custom_call.1} parent=1 // pred_region
      _
    $region5: #{tpu_custom_call.1} parent=1 // pred_fallthru
      _
    // Predicated region
    $region6: #{tpu_custom_call.1} parent=1 // pred_check
      _
    $region7: #{tpu_custom_call.1} parent=1 // pred_check_branch
      %12 = sbr.rel (0) target = $region9
    $region8: #{tpu_custom_call.1} parent=1 // pred_region
      _
    $region9: #{tpu_custom_call.1} parent=1 // pred_fallthru
      _
    // Predicated region
    $region10: #{tpu_custom_call.1} parent=1 // pred_check
      _
    $region11: #{tpu_custom_call.1} parent=1 // pred_check_branch
      %14 = sbr.rel (0) target = $region13
    $region12: #{tpu_custom_call.1} parent=1 // pred_region
      _
    $region13: #{tpu_custom_call.1} parent=1 // pred_fallthru
      _
    %v15 = vld [vmem:[%s0] sm:$0xff]
    %v16 = vld [vmem:[%s0 + $0x8] sm:$0xff]
    %v17 = vld [vmem:[%s1] sm:$0xff]
    %19 = vset.pattern.permute.xlu0 0
    %20 = vperm.xlu0 %19, %v17
    %v21 = vpop.permute.xlu0 %20
    %v23 = vmul.f32 %v15, %v21
    %v24 = vmul.f32 %v16, %v21
    %v25 = vld [vmem:[%s2] sm:$0xff]
    %27 = vset.pattern.permute.xlu0 0
    %28 = vperm.xlu0 %27, %v25
    %v29 = vpop.permute.xlu0 %28
    %v31 = vadd.f32 %v23, %v29
    %v32 = vadd.f32 %v24, %v29
    %33 = vst [vmem:[#allocation2] sm:$0xff] %v31
    %34 = vst [vmem:[#allocation2 + $0x8] sm:$0xff] %v32
    // Predicated region
    $region14: #{tpu_custom_call.1} parent=1 // pred_check
      _
    $region15: #{tpu_custom_call.1} parent=1 // pred_check_branch
      %36 = sbr.rel (0) target = $region17
    $region16: #{tpu_custom_call.1} parent=1 // pred_region
      %s38 = ssub.s32 256, 256
      %39 = vsyncadd [#allocation3], %s38
      %s41 = sshll.u32 [#allocation2], 4
      %s42 = int_to_ptr.vmem [resolvable:$true] %s41
      %44 = dma.vmem_to_hbm [thread:$0]  %s42, 256, %s3, [#allocation3]
    $region17: #{tpu_custom_call.1} parent=1 // pred_fallthru
      _
    // Predicated region
    $region18: #{tpu_custom_call.1} parent=1 // pred_check
      _
    $region19: #{tpu_custom_call.1} parent=1 // pred_check_branch
      %46 = sbr.rel (0) target = $region21
    $region20: #{tpu_custom_call.1} parent=1 // pred_region
      %47 = dma.done [#allocation3], 256
    $region21: #{tpu_custom_call.1} parent=1 // pred_fallthru
      _
    %48 = vsyncpa [#allocation3], 1

</llo_original>
